<compile_context>
chip_gen: v5e
topology: v5e:2x2
jax: 0.10.0
libtpu: 0.0.40
codegen_flags: <defaults>
</compile_context>

<pallas_src>
import copy
import math
from functools import partial

import jax
import jax.numpy as jnp
from jax.experimental import pallas as pl
from jax.experimental.pallas import tpu as pltpu

# Deterministic neuron constants (no learned parameters in MemoryModule).
TAU = 2.0
_INV_TAU = 1.0 / TAU          # exact for TAU=2.0, so it matches a divide-based reference
V_TH = 1.0
V_RESET = 0.0

_LANES = 128            # lane-dense last dim (multiple of 128)
_MAX_ROW_TILE = 1024    # rows per M tile; keeps blocks well under all VMEM budgets
_MAX_TIME_CHUNK = 16    # time steps fused per grid step

SPIKE_DTYPE = jnp.int8  # spikes are exactly 0/1 -> lossless at 1 B/elem


# ----------------------------- tiling helpers -----------------------------


def _compute_vmem_limit_bytes():
    """Explicit scoped-VMEM limit: 3/4 of physical, capped at 96 MiB.

    128 MiB chips (v5e/v6e) -> 96 MiB; v7x (64 MiB/TC) or unknown -> 48 MiB."""
    cap = 64 * 1024 * 1024          # conservative fallback (v7x per-core VMEM)
    try:
        cap = int(pltpu.get_tpu_info().vmem_capacity_bytes)
    except Exception:
        pass
    return int(min(96 * 1024 * 1024, (cap * 3) // 4))


_VMEM_LIMIT_BYTES = _compute_vmem_limit_bytes()


def _row_tile(M):
    """Row tile size.

    Small problems use the full dim. Larger ones are split into >= 2 tiles so
    the "parallel" M grid axis shards across both v7x TensorCores; tiles are
    multiples of 32 (int8 spike sublane tile) and capped at _MAX_ROW_TILE."""
    if M <= 64:
        return M
    half = -(-M // 2)                 # ceil(M / 2): at least two row tiles
    tm = -(-half // 32) * 32          # round up to a multiple of 32
    return min(tm, _MAX_ROW_TILE)


def _sub_rows(tm):
    """Row sub-tile kept in vregs across a time chunk (<=128 rows = 16 f32 vregs)."""
    for s in (128, 64, 32, 16, 8):
        if tm % s == 0:
            return s
    return tm


# ----------------------------- Pallas kernels -----------------------------


def _single_step_kernel(x_ref, v0_ref, spike_ref, v_out_ref):
    """One LIF step on a (TM, 128) tile: charge -> fire -> hard reset (VPU only)."""
    x = x_ref[...].astype(jnp.float32)
    v = v0_ref[...]
    v = v + (x - v) * _INV_TAU                    # leaky integration
    fired = v >= V_TH                             # fire
    spike_ref[...] = fired.astype(spike_ref.dtype)
    v_out_ref[...] = jnp.where(fired, V_RESET, v)  # hard reset


def _make_multi_step_kernel(total_t, tc):
    """Time-chunked LIF recurrence.

    Grid = (M row tiles ["parallel"], cdiv(T, TC) time chunks ["arbitrary"]).
    The membrane state lives in the resident `v_out_ref` output block (same
    block index for every time chunk of a given row tile), so no extra VMEM
    scratch is needed and the final state is written to HBM once per row tile.

    Inside a chunk, row sub-tiles are the outer static loop and time steps the
    inner one, so the membrane value of a sub-tile stays in vregs for the whole
    chunk (one x load + one spike store per element per step).

    When T % TC != 0 the last chunk is ragged: steps past T read Pallas block
    padding; their spike stores land in the discarded padded region and a
    scalar guard keeps them out of the carried membrane state."""
    rem = total_t % tc

    def kernel(x_ref, v0_ref, spike_ref, v_out_ref):
        ti = pl.program_id(1)

        @pl.when(ti == 0)
        def _():
            v_out_ref[...] = v0_ref[...]          # initial memory value for this row tile

        if rem != 0:
            not_last = ti < pl.num_programs(1) - 1

        tm = x_ref.shape[1]
        sub = _sub_rows(tm)

        for r0 in range(0, tm, sub):
            rows = pl.ds(r0, sub)                 # static slice: zero runtime cost
            v = v_out_ref[rows, :]                # (sub, 128) f32, held in vregs
            for t in range(tc):
                x = x_ref[t, rows, :].astype(jnp.float32)
                v_new = v + (x - v) * _INV_TAU    # leaky integration
                fired = v_new >= V_TH             # fire
                spike_ref[t, rows, :] = fired.astype(spike_ref.dtype)
                v_next = jnp.where(fired, V_RESET, v_new)   # hard reset
                if rem != 0 and t >= rem:
                    # Step exists only in non-final chunks; in the ragged final
                    # chunk keep v unchanged so padded x never enters the state.
                    v = jnp.where(not_last, v_next, v)
                else:
                    v = v_next
            v_out_ref[rows, :] = v

    return kernel


# ----------------------------- pallas_call wrappers -----------------------------


@partial(jax.jit, donate_argnums=(1,))
def _single_step_call(x2d, v2d):
    M, N = x2d.shape
    TM = _row_tile(M)
    grid_m = pl.cdiv(M, TM)
    return pl.pallas_call(
        _single_step_kernel,
        out_shape=(
            jax.ShapeDtypeStruct((M, N), SPIKE_DTYPE),   # spikes
            jax.ShapeDtypeStruct((M, N), jnp.float32),   # new membrane v
        ),
        grid_spec=pltpu.PrefetchScalarGridSpec(
            num_scalar_prefetch=0,
            grid=(grid_m,),
            in_specs=[
                pl.BlockSpec((TM, N), lambda m: (m, 0)),     # x tile
                pl.BlockSpec((TM, N), lambda m: (m, 0)),     # v0 tile
            ],
            out_specs=(
                pl.BlockSpec((TM, N), lambda m: (m, 0)),     # spikes tile
                pl.BlockSpec((TM, N), lambda m: (m, 0)),     # v_out tile
            ),
        ),
        input_output_aliases={1: 1},   # reuse (donated) v input buffer for v output
        compiler_params=pltpu.CompilerParams(
            dimension_semantics=("parallel",),
            vmem_limit_bytes=_VMEM_LIMIT_BYTES,
        ),
    )(x2d, v2d)


@partial(jax.jit, donate_argnums=(1,))
def _multi_step_call(x3d, v0_2d):
    T, M, N = x3d.shape
    TM = _row_tile(M)
    TC = min(T, _MAX_TIME_CHUNK)
    grid = (pl.cdiv(M, TM), pl.cdiv(T, TC))   # rows parallel (outer), time sequential (inner)
    kernel = _make_multi_step_kernel(T, TC)
    return pl.pallas_call(
        kernel,
        out_shape=(
            jax.ShapeDtypeStruct((T, M, N), SPIKE_DTYPE),   # spike sequence
            jax.ShapeDtypeStruct((M, N), jnp.float32),      # final membrane v
        ),
        grid_spec=pltpu.PrefetchScalarGridSpec(
            num_scalar_prefetch=0,
            grid=grid,
            in_specs=[
                pl.BlockSpec((TC, TM, N), lambda m, ti: (ti, m, 0)),   # x time chunk
                pl.BlockSpec((TM, N), lambda m, ti: (m, 0)),           # v0 (per row tile)
            ],
            out_specs=(
                pl.BlockSpec((TC, TM, N), lambda m, ti: (ti, m, 0)),   # spike time chunk
                pl.BlockSpec((TM, N), lambda m, ti: (m, 0)),           # resident v state
            ),
        ),
        input_output_aliases={1: 1},   # v0 input (donated) aliased onto v_final output
        compiler_params=pltpu.CompilerParams(
            dimension_semantics=("parallel", "arbitrary"),  # time is a recurrence
            vmem_limit_bytes=_VMEM_LIMIT_BYTES,
        ),
    )(x3d, v0_2d)


# ----------------------------- MemoryModule (JAX side) -----------------------------


class MemoryModule:
    """JAX port of the MemoryModule state machinery (memories dict, reset,
    step-mode dispatch)."""

    def __init__(self):
        object.__setattr__(self, "_memories", {})
        object.__setattr__(self, "_memories_rv", {})
        object.__setattr__(self, "_step_mode", "s")
        object.__setattr__(self, "_backend", "jax")

    # --- step mode ---
    def supported_step_mode(self):
        return ("s", "m")

    @property
    def step_mode(self):
        return self._step_mode

    @step_mode.setter
    def step_mode(self, value):
        if value not in self.supported_step_mode():
            raise ValueError(
                f'step_mode can only be {self.supported_step_mode()}, got "{value}"!'
            )
        object.__setattr__(self, "_step_mode", value)

    # --- memories ---
    def register_memory(self, name, value):
        assert name not in self.__dict__, f"{name} has been set as a member variable!"
        self._memories[name] = value
        self.set_reset_value(name, value)

    def set_reset_value(self, name, value):
        self._memories_rv[name] = copy.deepcopy(value)

    def reset(self):
        for key in self._memories:
            self._memories[key] = copy.deepcopy(self._memories_rv[key])

    def memories(self):
        for value in self._memories.values():
            yield value

    def named_memories(self):
        yield from self._memories.items()

    def __getattr__(self, name):
        memories = self.__dict__.get("_memories")
        if memories is not None and name in memories:
            return memories[name]
        raise AttributeError(name)

    def __setattr__(self, name, value):
        memories = self.__dict__.get("_memories")
        if memories is not None and name in memories:
            memories[name] = value
        else:
            object.__setattr__(self, name, value)

    # --- forward dispatch (exact semantics of MemoryModule.forward) ---
    def single_step_forward(self, x, *args, **kwargs):
        raise NotImplementedError

    def multi_step_forward(self, x_seq, *args, **kwargs):
        # Generic fallback: python loop over T (matches the torch base class).
        ys = [self.single_step_forward(x_seq[t], *args, **kwargs)[None]
              for t in range(x_seq.shape[0])]
        return jnp.concatenate(ys, axis=0)

    def forward(self, *args, **kwargs):
        if self.step_mode == "s":
            return self.single_step_forward(*args, **kwargs)
        elif self.step_mode == "m":
            return self.multi_step_forward(*args, **kwargs)
        else:
            raise ValueError(self.step_mode)

    __call__ = forward

    def extra_repr(self):
        return f"step_mode={self.step_mode}, backend={self._backend}"


class PallasLIFNode(MemoryModule):
    """Concrete MemoryModule with registered memory `v`; both step modes are
    computed by Pallas TPU kernels.

    The membrane memory `v` is kept in the kernel's lane-dense (M, 128) f32
    layout between calls and the buffer is donated/aliased (zero-copy state
    carry). Spikes are returned in the caller's NCHW shape as int8 (values are
    exactly 0/1). x may be fed in bf16 for half the read traffic; the kernel
    upcasts in-register."""

    def __init__(self, step_mode="s"):
        super().__init__()
        self.register_memory("v", V_RESET)  # membrane potential memory
        self.step_mode = step_mode

    # --- lane-dense flattening helpers ---
    @staticmethod
    def _padded_rows(numel):
        pad = (-numel) % _LANES
        return pad, (numel + pad) // _LANES

    def _v_lane_dense(self, M):
        v = self.v
        if isinstance(v, (int, float)):
            return jnp.full((M, _LANES), float(v), jnp.float32)
        v = jnp.asarray(v, jnp.float32)
        if v.ndim == 0:
            return jnp.full((M, _LANES), v, jnp.float32)
        if v.shape == (M, _LANES):
            return v
        flat = v.reshape(-1)
        pad = M * _LANES - flat.shape[0]
        if pad:
            flat = jnp.pad(flat, (0, pad))
        return flat.reshape(M, _LANES)

    # --- step modes ---
    def single_step_forward(self, x):
        shape = x.shape                              # NCHW [B, C, H, W]
        E = math.prod(shape)
        pad, M = self._padded_rows(E)
        flat = x.reshape(E)
        if pad:
            # NOTE: this pad (and the slice below) is an extra HBM pass; arrange
            # numel % 128 == 0 upstream to stay on the zero-copy reshape path.
            flat = jnp.pad(flat, (0, pad))
        x2d = flat.reshape(M, _LANES)                # lane-dense, no dtype cast
        spike2d, v_new = _single_step_call(x2d, self._v_lane_dense(M))
        self.v = v_new                               # keep state in kernel layout
        s = spike2d.reshape(M * _LANES)
        if pad:
            s = s[:E]
        return s.reshape(shape)

    def multi_step_forward(self, x_seq):
        T = x_seq.shape[0]
        shape = x_seq.shape[1:]                      # [B, C, H, W]
        E = math.prod(shape)
        pad, M = self._padded_rows(E)
        flat = x_seq.reshape(T, E)
        if pad:
            # NOTE: extra HBM pass; prefer numel % 128 == 0 (zero-copy reshape).
            flat = jnp.pad(flat, ((0, 0), (0, pad)))
        x3d = flat.reshape(T, M, _LANES)             # lane-dense, no dtype cast
        spike3d, v_final = _multi_step_call(x3d, self._v_lane_dense(M))
        self.v = v_final                             # keep state in kernel layout
        s = spike3d.reshape(T, M * _LANES)
        if pad:
            s = s[:, :E]
        return s.reshape((T,) + shape)


# ----------------------------- main -----------------------------


if __name__ == "__main__":
    key = jax.random.PRNGKey(0)
    k1, k2 = jax.random.split(key)

    # Pure-JAX reference of the same recurrence for correctness checks.
    def ref_scan(xs):
        def step(v, x):
            v = v + (x.astype(jnp.float32) - v) * _INV_TAU
            s = (v >= V_TH).astype(jnp.float32)
            return jnp.where(s > 0, V_RESET, v), s

        v0 = jnp.zeros(xs.shape[1:], jnp.float32)
        v_fin, ys = jax.lax.scan(step, v0, xs)
        return ys, v_fin

    # --- test 1: canonical small shape, f32 input, both step modes ---
    T, B, C, H, W = 8, 2, 4, 16, 16
    x_seq = jax.random.uniform(k1, (T, B, C, H, W), jnp.float32, 0.0, 2.0)

    node_m = PallasLIFNode(step_mode="m")            # whole sequence in one kernel
    y_m = node_m(x_seq)
    jax.block_until_ready(y_m)

    node_s = PallasLIFNode(step_mode="s")            # one step per call, v carried
    y_s_steps = [node_s(x_seq[t]) for t in range(T)]
    y_s_seq = jnp.stack(y_s_steps, axis=0)
    jax.block_until_ready(y_s_seq)

    ref1, vfin1 = ref_scan(x_seq)
    assert y_m.shape == (T, B, C, H, W) and y_s_steps[0].shape == (B, C, H, W)
    assert jnp.allclose(y_m.astype(jnp.float32), ref1, atol=1e-6), "multi-step mismatch"
    assert jnp.allclose(y_s_seq.astype(jnp.float32), ref1, atol=1e-6), \
        "single-step state-carry mismatch"
    E1 = B * C * H * W
    v_mod = node_m.v.reshape(-1)[:E1].reshape((B, C, H, W))
    assert jnp.allclose(v_mod, vfin1, atol=1e-6), "carried membrane state mismatch"

    # --- test 2: ragged T (in-kernel tail guard), bf16 input, M large enough to
    #             split the parallel row axis across two tiles / TensorCores ---
    T2, B2, C2, H2, W2 = 18, 2, 8, 32, 32
    x2 = jax.random.uniform(k2, (T2, B2, C2, H2, W2), jnp.float32, 0.0, 2.0)
    x2 = x2.astype(jnp.bfloat16)                     # half the dominant read traffic

    node2 = PallasLIFNode(step_mode="m")
    y2 = node2(x2)
    jax.block_until_ready(y2)
    ref2, _ = ref_scan(x2)
    assert y2.shape == (T2, B2, C2, H2, W2)
    assert jnp.allclose(y2.astype(jnp.float32), ref2, atol=1e-6), \
        "ragged-T / bf16 multi-step mismatch"

    print("KERNEL_OK")
</pallas_src>

<mosaic_0001>
module attributes {stable_mosaic.version = 11 : i64} {
  func.func @kernel(%arg0: i32, %arg1: i32, %arg2: memref<8x16x128xf32, #tpu.memory_space<vmem>>, %arg3: memref<16x128xf32, #tpu.memory_space<vmem>>, %arg4: memref<8x16x128xi8, #tpu.memory_space<vmem>>, %arg5: memref<16x128xf32, #tpu.memory_space<vmem>>) attributes {dimension_semantics = [#tpu.dimension_semantics<parallel>, #tpu.dimension_semantics<arbitrary>], iteration_bounds = array<i64: 1, 1>, scalar_prefetch = 0 : i64, scratch_operands = 0 : i64, tpu.core_type = #tpu.core_type<tc>, window_params = [{transform_indices = @transform_0, window_bounds = array<i64: 8, 16, 128>}, {transform_indices = @transform_1, window_bounds = array<i64: 16, 128>}, {transform_indices = @transform_2, window_bounds = array<i64: 8, 16, 128>}, {transform_indices = @transform_3, window_bounds = array<i64: 16, 128>}]} {
    %c0_i32 = arith.constant 0 : i32
    %0 = arith.cmpi eq, %arg1, %c0_i32 : i32
    %1 = arith.extui %0 : i1 to i32
    %c0_i32_0 = arith.constant 0 : i32
    %2 = arith.cmpi ne, %1, %c0_i32_0 : i32
    scf.if %2 {
      %c0_68 = arith.constant 0 : index
      %c0_69 = arith.constant 0 : index
      %117 = vector.load %arg3[%c0_68, %c0_69] : memref<16x128xf32, #tpu.memory_space<vmem>>, vector<16x128xf32>
      %c0_70 = arith.constant 0 : index
      %c0_71 = arith.constant 0 : index
      %118 = vector.load %arg5[%c0_70, %c0_71] : memref<16x128xf32, #tpu.memory_space<vmem>>, vector<16x128xf32>
      tpu.vector_store %arg5[%c0_70, %c0_71], %117 {strides = array<i32>} : memref<16x128xf32, #tpu.memory_space<vmem>>, vector<16x128xf32>,
    } else {
    }
    %c0 = arith.constant 0 : index
    %c0_1 = arith.constant 0 : index
    %3 = vector.load %arg5[%c0, %c0_1] : memref<16x128xf32, #tpu.memory_space<vmem>>, vector<16x128xf32>
    %c0_2 = arith.constant 0 : index
    %c0_3 = arith.constant 0 : index
    %c0_4 = arith.constant 0 : index
    %4 = vector.load %arg2[%c0_2, %c0_3, %c0_4] : memref<8x16x128xf32, #tpu.memory_space<vmem>>, vector<1x16x128xf32>
    %5 = vector.shape_cast %4 : vector<1x16x128xf32> to vector<16x128xf32>
    %6 = arith.subf %5, %3 : vector<16x128xf32>
    %cst = arith.constant 5.000000e-01 : f32
    %7 = vector.broadcast %cst : f32 to vector<16x128xf32>
    %8 = arith.mulf %6, %7 : vector<16x128xf32>
    %9 = arith.addf %3, %8 : vector<16x128xf32>
    %cst_5 = arith.constant 1.000000e+00 : f32
    %10 = vector.broadcast %cst_5 : f32 to vector<16x128xf32>
    %11 = arith.cmpf oge, %9, %10 : vector<16x128xf32>
    %12 = arith.extui %11 : vector<16x128xi1> to vector<16x128xi8>
    %c0_6 = arith.constant 0 : index
    %c0_7 = arith.constant 0 : index
    %c0_8 = arith.constant 0 : index
    %13 = vector.load %arg4[%c0_6, %c0_7, %c0_8] : memref<8x16x128xi8, #tpu.memory_space<vmem>>, vector<1x16x128xi8>
    %14 = vector.shape_cast %13 : vector<1x16x128xi8> to vector<16x128xi8>
    %15 = vector.shape_cast %12 : vector<16x128xi8> to vector<1x16x128xi8>
    tpu.vector_store %arg4[%c0_6, %c0_7, %c0_8], %15 {strides = array<i32>} : memref<8x16x128xi8, #tpu.memory_space<vmem>>, vector<1x16x128xi8>,
    %cst_9 = arith.constant 0.000000e+00 : f32
    %16 = vector.broadcast %cst_9 : f32 to vector<16x128xf32>
    %17 = arith.select %11, %16, %9 : vector<16x128xi1>, vector<16x128xf32>
    %c1 = arith.constant 1 : index
    %c0_10 = arith.constant 0 : index
    %c0_11 = arith.constant 0 : index
    %18 = vector.load %arg2[%c1, %c0_10, %c0_11] : memref<8x16x128xf32, #tpu.memory_space<vmem>>, vector<1x16x128xf32>
    %19 = vector.shape_cast %18 : vector<1x16x128xf32> to vector<16x128xf32>
    %20 = arith.subf %19, %17 : vector<16x128xf32>
    %cst_12 = arith.constant 5.000000e-01 : f32
    %21 = vector.broadcast %cst_12 : f32 to vector<16x128xf32>
    %22 = arith.mulf %20, %21 : vector<16x128xf32>
    %23 = arith.addf %17, %22 : vector<16x128xf32>
    %cst_13 = arith.constant 1.000000e+00 : f32
    %24 = vector.broadcast %cst_13 : f32 to vector<16x128xf32>
    %25 = arith.cmpf oge, %23, %24 : vector<16x128xf32>
    %26 = arith.extui %25 : vector<16x128xi1> to vector<16x128xi8>
    %c1_14 = arith.constant 1 : index
    %c0_15 = arith.constant 0 : index
    %c0_16 = arith.constant 0 : index
    %27 = vector.load %arg4[%c1_14, %c0_15, %c0_16] : memref<8x16x128xi8, #tpu.memory_space<vmem>>, vector<1x16x128xi8>
    %28 = vector.shape_cast %27 : vector<1x16x128xi8> to vector<16x128xi8>
    %29 = vector.shape_cast %26 : vector<16x128xi8> to vector<1x16x128xi8>
    tpu.vector_store %arg4[%c1_14, %c0_15, %c0_16], %29 {strides = array<i32>} : memref<8x16x128xi8, #tpu.memory_space<vmem>>, vector<1x16x128xi8>,
    %cst_17 = arith.constant 0.000000e+00 : f32
    %30 = vector.broadcast %cst_17 : f32 to vector<16x128xf32>
    %31 = arith.select %25, %30, %23 : vector<16x128xi1>, vector<16x128xf32>
    %c2 = arith.constant 2 : index
    %c0_18 = arith.constant 0 : index
    %c0_19 = arith.constant 0 : index
    %32 = vector.load %arg2[%c2, %c0_18, %c0_19] : memref<8x16x128xf32, #tpu.memory_space<vmem>>, vector<1x16x128xf32>
    %33 = vector.shape_cast %32 : vector<1x16x128xf32> to vector<16x128xf32>
    %34 = arith.subf %33, %31 : vector<16x128xf32>
    %cst_20 = arith.constant 5.000000e-01 : f32
    %35 = vector.broadcast %cst_20 : f32 to vector<16x128xf32>
    %36 = arith.mulf %34, %35 : vector<16x128xf32>
    %37 = arith.addf %31, %36 : vector<16x128xf32>
    %cst_21 = arith.constant 1.000000e+00 : f32
    %38 = vector.broadcast %cst_21 : f32 to vector<16x128xf32>
    %39 = arith.cmpf oge, %37, %38 : vector<16x128xf32>
    %40 = arith.extui %39 : vector<16x128xi1> to vector<16x128xi8>
    %c2_22 = arith.constant 2 : index
    %c0_23 = arith.constant 0 : index
    %c0_24 = arith.constant 0 : index
    %41 = vector.load %arg4[%c2_22, %c0_23, %c0_24] : memref<8x16x128xi8, #tpu.memory_space<vmem>>, vector<1x16x128xi8>
    %42 = vector.shape_cast %41 : vector<1x16x128xi8> to vector<16x128xi8>
    %43 = vector.shape_cast %40 : vector<16x128xi8> to vector<1x16x128xi8>
    tpu.vector_store %arg4[%c2_22, %c0_23, %c0_24], %43 {strides = array<i32>} : memref<8x16x128xi8, #tpu.memory_space<vmem>>, vector<1x16x128xi8>,
    %cst_25 = arith.constant 0.000000e+00 : f32
    %44 = vector.broadcast %cst_25 : f32 to vector<16x128xf32>
    %45 = arith.select %39, %44, %37 : vector<16x128xi1>, vector<16x128xf32>
    %c3 = arith.constant 3 : index
    %c0_26 = arith.constant 0 : index
    %c0_27 = arith.constant 0 : index
    %46 = vector.load %arg2[%c3, %c0_26, %c0_27] : memref<8x16x128xf32, #tpu.memory_space<vmem>>, vector<1x16x128xf32>
    %47 = vector.shape_cast %46 : vector<1x16x128xf32> to vector<16x128xf32>
    %48 = arith.subf %47, %45 : vector<16x128xf32>
    %cst_28 = arith.constant 5.000000e-01 : f32
    %49 = vector.broadcast %cst_28 : f32 to vector<16x128xf32>
    %50 = arith.mulf %48, %49 : vector<16x128xf32>
    %51 = arith.addf %45, %50 : vector<16x128xf32>
    %cst_29 = arith.constant 1.000000e+00 : f32
    %52 = vector.broadcast %cst_29 : f32 to vector<16x128xf32>
    %53 = arith.cmpf oge, %51, %52 : vector<16x128xf32>
    %54 = arith.extui %53 : vector<16x128xi1> to vector<16x128xi8>
    %c3_30 = arith.constant 3 : index
    %c0_31 = arith.constant 0 : index
    %c0_32 = arith.constant 0 : index
    %55 = vector.load %arg4[%c3_30, %c0_31, %c0_32] : memref<8x16x128xi8, #tpu.memory_space<vmem>>, vector<1x16x128xi8>
    %56 = vector.shape_cast %55 : vector<1x16x128xi8> to vector<16x128xi8>
    %57 = vector.shape_cast %54 : vector<16x128xi8> to vector<1x16x128xi8>
    tpu.vector_store %arg4[%c3_30, %c0_31, %c0_32], %57 {strides = array<i32>} : memref<8x16x128xi8, #tpu.memory_space<vmem>>, vector<1x16x128xi8>,
    %cst_33 = arith.constant 0.000000e+00 : f32
    %58 = vector.broadcast %cst_33 : f32 to vector<16x128xf32>
    %59 = arith.select %53, %58, %51 : vector<16x128xi1>, vector<16x128xf32>
    %c4 = arith.constant 4 : index
    %c0_34 = arith.constant 0 : index
    %c0_35 = arith.constant 0 : index
    %60 = vector.load %arg2[%c4, %c0_34, %c0_35] : memref<8x16x128xf32, #tpu.memory_space<vmem>>, vector<1x16x128xf32>
    %61 = vector.shape_cast %60 : vector<1x16x128xf32> to vector<16x128xf32>
    %62 = arith.subf %61, %59 : vector<16x128xf32>
    %cst_36 = arith.constant 5.000000e-01 : f32
    %63 = vector.broadcast %cst_36 : f32 to vector<16x128xf32>
    %64 = arith.mulf %62, %63 : vector<16x128xf32>
    %65 = arith.addf %59, %64 : vector<16x128xf32>
    %cst_37 = arith.constant 1.000000e+00 : f32
    %66 = vector.broadcast %cst_37 : f32 to vector<16x128xf32>
    %67 = arith.cmpf oge, %65, %66 : vector<16x128xf32>
    %68 = arith.extui %67 : vector<16x128xi1> to vector<16x128xi8>
    %c4_38 = arith.constant 4 : index
    %c0_39 = arith.constant 0 : index
    %c0_40 = arith.constant 0 : index
    %69 = vector.load %arg4[%c4_38, %c0_39, %c0_40] : memref<8x16x128xi8, #tpu.memory_space<vmem>>, vector<1x16x128xi8>
    %70 = vector.shape_cast %69 : vector<1x16x128xi8> to vector<16x128xi8>
    %71 = vector.shape_cast %68 : vector<16x128xi8> to vector<1x16x128xi8>
    tpu.vector_store %arg4[%c4_38, %c0_39, %c0_40], %71 {strides = array<i32>} : memref<8x16x128xi8, #tpu.memory_space<vmem>>, vector<1x16x128xi8>,
    %cst_41 = arith.constant 0.000000e+00 : f32
    %72 = vector.broadcast %cst_41 : f32 to vector<16x128xf32>
    %73 = arith.select %67, %72, %65 : vector<16x128xi1>, vector<16x128xf32>
    %c5 = arith.constant 5 : index
    %c0_42 = arith.constant 0 : index
    %c0_43 = arith.constant 0 : index
    %74 = vector.load %arg2[%c5, %c0_42, %c0_43] : memref<8x16x128xf32, #tpu.memory_space<vmem>>, vector<1x16x128xf32>
    %75 = vector.shape_cast %74 : vector<1x16x128xf32> to vector<16x128xf32>
    %76 = arith.subf %75, %73 : vector<16x128xf32>
    %cst_44 = arith.constant 5.000000e-01 : f32
    %77 = vector.broadcast %cst_44 : f32 to vector<16x128xf32>
    %78 = arith.mulf %76, %77 : vector<16x128xf32>
    %79 = arith.addf %73, %78 : vector<16x128xf32>
    %cst_45 = arith.constant 1.000000e+00 : f32
    %80 = vector.broadcast %cst_45 : f32 to vector<16x128xf32>
    %81 = arith.cmpf oge, %79, %80 : vector<16x128xf32>
    %82 = arith.extui %81 : vector<16x128xi1> to vector<16x128xi8>
    %c5_46 = arith.constant 5 : index
    %c0_47 = arith.constant 0 : index
    %c0_48 = arith.constant 0 : index
    %83 = vector.load %arg4[%c5_46, %c0_47, %c0_48] : memref<8x16x128xi8, #tpu.memory_space<vmem>>, vector<1x16x128xi8>
    %84 = vector.shape_cast %83 : vector<1x16x128xi8> to vector<16x128xi8>
    %85 = vector.shape_cast %82 : vector<16x128xi8> to vector<1x16x128xi8>
    tpu.vector_store %arg4[%c5_46, %c0_47, %c0_48], %85 {strides = array<i32>} : memref<8x16x128xi8, #tpu.memory_space<vmem>>, vector<1x16x128xi8>,
    %cst_49 = arith.constant 0.000000e+00 : f32
    %86 = vector.broadcast %cst_49 : f32 to vector<16x128xf32>
    %87 = arith.select %81, %86, %79 : vector<16x128xi1>, vector<16x128xf32>
    %c6 = arith.constant 6 : index
    %c0_50 = arith.constant 0 : index
    %c0_51 = arith.constant 0 : index
    %88 = vector.load %arg2[%c6, %c0_50, %c0_51] : memref<8x16x128xf32, #tpu.memory_space<vmem>>, vector<1x16x128xf32>
    %89 = vector.shape_cast %88 : vector<1x16x128xf32> to vector<16x128xf32>
    %90 = arith.subf %89, %87 : vector<16x128xf32>
    %cst_52 = arith.constant 5.000000e-01 : f32
    %91 = vector.broadcast %cst_52 : f32 to vector<16x128xf32>
    %92 = arith.mulf %90, %91 : vector<16x128xf32>
    %93 = arith.addf %87, %92 : vector<16x128xf32>
    %cst_53 = arith.constant 1.000000e+00 : f32
    %94 = vector.broadcast %cst_53 : f32 to vector<16x128xf32>
    %95 = arith.cmpf oge, %93, %94 : vector<16x128xf32>
    %96 = arith.extui %95 : vector<16x128xi1> to vector<16x128xi8>
    %c6_54 = arith.constant 6 : index
    %c0_55 = arith.constant 0 : index
    %c0_56 = arith.constant 0 : index
    %97 = vector.load %arg4[%c6_54, %c0_55, %c0_56] : memref<8x16x128xi8, #tpu.memory_space<vmem>>, vector<1x16x128xi8>
    %98 = vector.shape_cast %97 : vector<1x16x128xi8> to vector<16x128xi8>
    %99 = vector.shape_cast %96 : vector<16x128xi8> to vector<1x16x128xi8>
    tpu.vector_store %arg4[%c6_54, %c0_55, %c0_56], %99 {strides = array<i32>} : memref<8x16x128xi8, #tpu.memory_space<vmem>>, vector<1x16x128xi8>,
    %cst_57 = arith.constant 0.000000e+00 : f32
    %100 = vector.broadcast %cst_57 : f32 to vector<16x128xf32>
    %101 = arith.select %95, %100, %93 : vector<16x128xi1>, vector<16x128xf32>
    %c7 = arith.constant 7 : index
    %c0_58 = arith.constant 0 : index
    %c0_59 = arith.constant 0 : index
    %102 = vector.load %arg2[%c7, %c0_58, %c0_59] : memref<8x16x128xf32, #tpu.memory_space<vmem>>, vector<1x16x128xf32>
    %103 = vector.shape_cast %102 : vector<1x16x128xf32> to vector<16x128xf32>
    %104 = arith.subf %103, %101 : vector<16x128xf32>
    %cst_60 = arith.constant 5.000000e-01 : f32
    %105 = vector.broadcast %cst_60 : f32 to vector<16x128xf32>
    %106 = arith.mulf %104, %105 : vector<16x128xf32>
    %107 = arith.addf %101, %106 : vector<16x128xf32>
    %cst_61 = arith.constant 1.000000e+00 : f32
    %108 = vector.broadcast %cst_61 : f32 to vector<16x128xf32>
    %109 = arith.cmpf oge, %107, %108 : vector<16x128xf32>
    %110 = arith.extui %109 : vector<16x128xi1> to vector<16x128xi8>
    %c7_62 = arith.constant 7 : index
    %c0_63 = arith.constant 0 : index
    %c0_64 = arith.constant 0 : index
    %111 = vector.load %arg4[%c7_62, %c0_63, %c0_64] : memref<8x16x128xi8, #tpu.memory_space<vmem>>, vector<1x16x128xi8>
    %112 = vector.shape_cast %111 : vector<1x16x128xi8> to vector<16x128xi8>
    %113 = vector.shape_cast %110 : vector<16x128xi8> to vector<1x16x128xi8>
    tpu.vector_store %arg4[%c7_62, %c0_63, %c0_64], %113 {strides = array<i32>} : memref<8x16x128xi8, #tpu.memory_space<vmem>>, vector<1x16x128xi8>,
    %cst_65 = arith.constant 0.000000e+00 : f32
    %114 = vector.broadcast %cst_65 : f32 to vector<16x128xf32>
    %115 = arith.select %109, %114, %107 : vector<16x128xi1>, vector<16x128xf32>
    %c0_66 = arith.constant 0 : index
    %c0_67 = arith.constant 0 : index
    %116 = vector.load %arg5[%c0_66, %c0_67] : memref<16x128xf32, #tpu.memory_space<vmem>>, vector<16x128xf32>
    tpu.vector_store %arg5[%c0_66, %c0_67], %115 {strides = array<i32>} : memref<16x128xf32, #tpu.memory_space<vmem>>, vector<16x128xf32>,
    return
  }
  func.func @transform_0(%arg0: i32, %arg1: i32) -> (i32, i32, i32) {
    %c0_i32 = arith.constant 0 : i32
    %c0_i32_0 = arith.constant 0 : i32
    return %arg1, %arg0, %c0_i32 : i32, i32, i32
  }
  func.func @transform_1(%arg0: i32, %arg1: i32) -> (i32, i32) {
    %c0_i32 = arith.constant 0 : i32
    %c0_i32_0 = arith.constant 0 : i32
    return %arg0, %c0_i32 : i32, i32
  }
  func.func @transform_2(%arg0: i32, %arg1: i32) -> (i32, i32, i32) {
    %c0_i32 = arith.constant 0 : i32
    %c0_i32_0 = arith.constant 0 : i32
    return %arg1, %arg0, %c0_i32 : i32, i32, i32
  }
  func.func @transform_3(%arg0: i32, %arg1: i32) -> (i32, i32) {
    %c0_i32 = arith.constant 0 : i32
    %c0_i32_0 = arith.constant 0 : i32
    return %arg0, %c0_i32 : i32, i32
  }
}

</mosaic_0001>

<llo_original>
// kernel: _multi_step_call.1
$region0: #{_multi_step_call.1}
  #allocation0 [shape = 'u32[]', space=smem, size = 0x4, offset = 0x4, fixed_abs, tag = 'smem constant byte address 0x4 - core index']
  #allocation1 [shape = 'u32[72,128]{1,0:T(1,128)}', space=vmem, size = 0x9000, scoped, tag = 'internal scratch']
  %s0 = inlined_call_operand.hbm [shape: f32[8,16,128], index: 0, kind: input, shape index: {}]
  %s1 = inlined_call_operand.hbm [shape: f32[16,128], index: 1, kind: input, shape index: {}, may-alias: {1,3}]
  %s2 = inlined_call_operand.hbm [shape: s8[8,16,128], index: 2, kind: output, shape index: {0}]
  %s3 = inlined_call_operand.hbm [shape: f32[16,128], index: 3, kind: output, shape index: {1}, may-alias: {1,3}]
  %4 = xla_tuple %s2, %s3
  %s5 = sld [smem:[#allocation0]]
  $region38: #{_multi_step_call.1} parent=0
    _
  %s7 = ssub.s32 1, %s5
  %s8 = scalar_select 0, %s7, %s5
  $region1: #{_multi_step_call.1} parent=0
    #allocation2 [shape = 'u8[65536]{0}', space=vmem, size = 0x10000, scoped, tag = 'input window, operand 0, single buffered']
    #allocation3 [shape = 's32[1]{0}', space=sflag, size = 0x4, scoped, tag = 'scoped memory for _multi_step_call.1']
    #allocation4 [shape = 's32[1]{0}', space=sflag, size = 0x4, scoped, tag = 'scoped memory for _multi_step_call.1']
    #allocation5 [shape = 'u8[8192]{0}', space=vmem, size = 0x2000, scoped, tag = 'input window, operand 1, single buffered']
    #allocation6 [shape = 's32[1]{0}', space=sflag, size = 0x4, scoped, tag = 'scoped memory for _multi_step_call.1']
    #allocation7 [shape = 'u8[16384]{0}', space=vmem, size = 0x4000, scoped, tag = 'output window, operand 0, single buffered']
    #allocation8 [shape = 'u8[8192]{0}', space=vmem, size = 0x2000, scoped, tag = 'output window, operand 1, single buffered']
    #allocation9 [shape = 's32[1]{0}', space=sflag, size = 0x4, scoped, tag = 'scoped memory for _multi_step_call.1']
    %9 = vsyncpa [#allocation3], 0
    %10 = vsyncpa [#allocation6], 0
    %11 = vsyncpa [#allocation4], 0
    %12 = vsyncpa [#allocation9], 0
    // Predicated region
    $region2: #{_multi_step_call.1} parent=1 // pred_check
      _
    $region3: #{_multi_step_call.1} parent=1 // pred_check_branch
      %14 = sbr.rel (0) target = $region5
    $region4: #{_multi_step_call.1} parent=1 // pred_region
      %16 = vsyncadd [#allocation3], 0
      %s17 = sshll.u32 %s0, 4
      %s18 = int_to_ptr.hbm [resolvable:$true] %s17
      %s19 = sshll.u32 [#allocation2], 4
      %s20 = int_to_ptr.vmem [resolvable:$true] %s19
      %25 = dma.hbm_to_vmem [thread:$0]  %s18, 2048, %s20, [#allocation3], 128, 128, 8
    $region5: #{_multi_step_call.1} parent=1 // pred_fallthru
      _
    // Predicated region
    $region6: #{_multi_step_call.1} parent=1 // pred_check
      _
    $region7: #{_multi_step_call.1} parent=1 // pred_check_branch
      %27 = sbr.rel (0) target = $region9
    $region8: #{_multi_step_call.1} parent=1 // pred_region
      %29 = vsyncadd [#allocation6], 0
      %s30 = sshll.u32 %s1, 4
      %s31 = int_to_ptr.hbm [resolvable:$true] %s30
      %s32 = sshll.u32 [#allocation5], 4
      %s33 = int_to_ptr.vmem [resolvable:$true] %s32
      %38 = dma.hbm_to_vmem [thread:$0]  %s31, 256, %s33, [#allocation6], 128, 128, 8
    $region9: #{_multi_step_call.1} parent=1 // pred_fallthru
      _
    // Predicated region
    $region10: #{_multi_step_call.1} parent=1 // pred_check
      _
    $region11: #{_multi_step_call.1} parent=1 // pred_check_branch
      %40 = sbr.rel (0) target = $region13
    $region12: #{_multi_step_call.1} parent=1 // pred_region
      %42 = dma.done [#allocation3], 2048
    $region13: #{_multi_step_call.1} parent=1 // pred_fallthru
      _
    // Predicated region
    $region14: #{_multi_step_call.1} parent=1 // pred_check
      _
    $region15: #{_multi_step_call.1} parent=1 // pred_check_branch
      %44 = sbr.rel (0) target = $region17
    $region16: #{_multi_step_call.1} parent=1 // pred_region
      %46 = dma.done [#allocation6], 256
    $region17: #{_multi_step_call.1} parent=1 // pred_fallthru
      _
    %p49 = scmp.eq.s32.totalorder 0, 0
    // Predicated region
    $region18: #{_multi_step_call.1} parent=1 // pred_check
      %p50 = pneg %p49
    $region19: #{_multi_step_call.1} parent=1 // pred_check_branch
      %52 = sbr.rel (%p50) target = $region21
    $region20: #{_multi_step_call.1} parent=1 // pred_region
      %v53 = vld [vmem:[#allocation5] sm:$0xff]
      %v54 = vld [vmem:[#allocation5 + $0x8] sm:$0xff]
      %55 = vst [vmem:[#allocation8] sm:$0xff] %v53
      %56 = vst [vmem:[#allocation8 + $0x8] sm:$0xff] %v54
    $region21: #{_multi_step_call.1} parent=1 // pred_fallthru
      _
    %v57 = vld [vmem:[#allocation8] sm:$0xff]
    %v58 = vld [vmem:[#allocation8 + $0x8] sm:$0xff]
    %v59 = vld [vmem:[#allocation2] sm:$0xff]
    %v60 = vld [vmem:[#allocation2 + $0x8] sm:$0xff]
    %v61 = vsub.f32 %v59, %v57
    %v62 = vsub.f32 %v60, %v58
    %v63 = vmul.f32 %v61, 0.5
    %v64 = vmul.f32 %v62, 0.5
    %v65 = vadd.f32 %v57, %v63
    %v66 = vadd.f32 %v58, %v64
    %vm67 = vcmp.ge.f32.partialorder %v65, 1.0
    %vm68 = vcmp.ge.f32.partialorder %v66, 1.0
    %vm69 = vmpackc.low %vm68, %vm67
    %v70 = vsel %vm69, 16711935, 0
    %v71 = vsel %vm69, 16711935, 0
    %v72 = vpack.c.b8 %v71, %v70
    %vm73 = vnez %v72
    %v74 = vsel %vm73, 16843009, 0
    %v75 = vunpack.c.0.s8 %v74
    %v76 = vunpack.c.1.s8 %v74
    %v77 = vpack.c.b16 %v75, %v75
    %v78 = vpack.c.b8 %v77, %v77
    %v79 = vpack.c.b16 %v76, %v76
    %v80 = vpack.c.b8 %v79, %v79
    %81 = vst [vmem:[#allocation7] sm:$0x3] %v78
    %82 = vst [vmem:[#allocation7 + $0x2] sm:$0x3] %v80
    %v83 = vsel %vm67, 0.0, %v65
    %v84 = vsel %vm68, 0.0, %v66
    %s85 = scalar_lea.vmem [#allocation2], 16
    %v86 = vld [vmem:[%s85] sm:$0xff]
    %v87 = vld [vmem:[%s85 + $0x8] sm:$0xff]
    %v88 = vsub.f32 %v86, %v83
    %v89 = vsub.f32 %v87, %v84
    %v90 = vmul.f32 %v88, 0.5
    %v91 = vmul.f32 %v89, 0.5
    %v92 = vadd.f32 %v83, %v90
    %v93 = vadd.f32 %v84, %v91
    %vm94 = vcmp.ge.f32.partialorder %v92, 1.0
    %vm95 = vcmp.ge.f32.partialorder %v93, 1.0
    %vm96 = vmpackc.low %vm95, %vm94
    %v97 = vsel %vm96, 16711935, 0
    %v98 = vsel %vm96, 16711935, 0
    %v99 = vpack.c.b8 %v98, %v97
    %vm100 = vnez %v99
    %v101 = vsel %vm100, 16843009, 0
    %v102 = vunpack.c.0.s8 %v101
    %v103 = vunpack.c.1.s8 %v101
    %v104 = vpack.c.b16 %v102, %v102
    %v105 = vpack.c.b8 %v104, %v104
    %v106 = vpack.c.b16 %v103, %v103
    %v107 = vpack.c.b8 %v106, %v106
    %s108 = scalar_lea.vmem [#allocation7], 4
    %109 = vst [vmem:[%s108] sm:$0x3] %v105
    %110 = vst [vmem:[%s108 + $0x2] sm:$0x3] %v107
    %v111 = vsel %vm94, 0.0, %v92
    %v112 = vsel %vm95, 0.0, %v93
    %s113 = scalar_lea.vmem [#allocation2], 32
    %v114 = vld [vmem:[%s113] sm:$0xff]
    %v115 = vld [vmem:[%s113 + $0x8] sm:$0xff]
    %v116 = vsub.f32 %v114, %v111
    %v117 = vsub.f32 %v115, %v112
    %v118 = vmul.f32 %v116, 0.5
    %v119 = vmul.f32 %v117, 0.5
    %v120 = vadd.f32 %v111, %v118
    %v121 = vadd.f32 %v112, %v119
    %vm122 = vcmp.ge.f32.partialorder %v120, 1.0
    %vm123 = vcmp.ge.f32.partialorder %v121, 1.0
    %vm124 = vmpackc.low %vm123, %vm122
    %v125 = vsel %vm124, 16711935, 0
    %v126 = vsel %vm124, 16711935, 0
    %v127 = vpack.c.b8 %v126, %v125
    %vm128 = vnez %v127
    %v129 = vsel %vm128, 16843009, 0
    %v130 = vunpack.c.0.s8 %v129
    %v131 = vunpack.c.1.s8 %v129
    %v132 = vpack.c.b16 %v130, %v130
    %v133 = vpack.c.b8 %v132, %v132
    %v134 = vpack.c.b16 %v131, %v131
    %v135 = vpack.c.b8 %v134, %v134
    %s136 = scalar_lea.vmem [#allocation7], 8
    %137 = vst [vmem:[%s136] sm:$0x3] %v133
    %138 = vst [vmem:[%s136 + $0x2] sm:$0x3] %v135
    %v139 = vsel %vm122, 0.0, %v120
    %v140 = vsel %vm123, 0.0, %v121
    %s141 = scalar_lea.vmem [#allocation2], 48
    %v142 = vld [vmem:[%s141] sm:$0xff]
    %v143 = vld [vmem:[%s141 + $0x8] sm:$0xff]
    %v144 = vsub.f32 %v142, %v139
    %v145 = vsub.f32 %v143, %v140
    %v146 = vmul.f32 %v144, 0.5
    %v147 = vmul.f32 %v145, 0.5
    %v148 = vadd.f32 %v139, %v146
    %v149 = vadd.f32 %v140, %v147
    %vm150 = vcmp.ge.f32.partialorder %v148, 1.0
    %vm151 = vcmp.ge.f32.partialorder %v149, 1.0
    %vm152 = vmpackc.low %vm151, %vm150
    %v153 = vsel %vm152, 16711935, 0
    %v154 = vsel %vm152, 16711935, 0
    %v155 = vpack.c.b8 %v154, %v153
    %vm156 = vnez %v155
    %v157 = vsel %vm156, 16843009, 0
    %v158 = vunpack.c.0.s8 %v157
    %v159 = vunpack.c.1.s8 %v157
    %v160 = vpack.c.b16 %v158, %v158
    %v161 = vpack.c.b8 %v160, %v160
    %v162 = vpack.c.b16 %v159, %v159
    %v163 = vpack.c.b8 %v162, %v162
    %s164 = scalar_lea.vmem [#allocation7], 12
    %165 = vst [vmem:[%s164] sm:$0x3] %v161
    %166 = vst [vmem:[%s164 + $0x2] sm:$0x3] %v163
    %v167 = vsel %vm150, 0.0, %v148
    %v168 = vsel %vm151, 0.0, %v149
    %s169 = scalar_lea.vmem [#allocation2], 64
    %v170 = vld [vmem:[%s169] sm:$0xff]
    %v171 = vld [vmem:[%s169 + $0x8] sm:$0xff]
    %v172 = vsub.f32 %v170, %v167
    %v173 = vsub.f32 %v171, %v168
    %v174 = vmul.f32 %v172, 0.5
    %v175 = vmul.f32 %v173, 0.5
    %v176 = vadd.f32 %v167, %v174
    %v177 = vadd.f32 %v168, %v175
    %vm178 = vcmp.ge.f32.partialorder %v176, 1.0
    %vm179 = vcmp.ge.f32.partialorder %v177, 1.0
    %vm180 = vmpackc.low %vm179, %vm178
    %v181 = vsel %vm180, 16711935, 0
    %v182 = vsel %vm180, 16711935, 0
    %v183 = vpack.c.b8 %v182, %v181
    %vm184 = vnez %v183
    %v185 = vsel %vm184, 16843009, 0
    %v186 = vunpack.c.0.s8 %v185
    %v187 = vunpack.c.1.s8 %v185
    %v188 = vpack.c.b16 %v186, %v186
    %v189 = vpack.c.b8 %v188, %v188
    %v190 = vpack.c.b16 %v187, %v187
    %v191 = vpack.c.b8 %v190, %v190
    %s192 = scalar_lea.vmem [#allocation7], 16
    %193 = vst [vmem:[%s192] sm:$0x3] %v189
    %194 = vst [vmem:[%s192 + $0x2] sm:$0x3] %v191
    %v195 = vsel %vm178, 0.0, %v176
    %v196 = vsel %vm179, 0.0, %v177
    %s197 = scalar_lea.vmem [#allocation2], 80
    %v198 = vld [vmem:[%s197] sm:$0xff]
    %v199 = vld [vmem:[%s197 + $0x8] sm:$0xff]
    %v200 = vsub.f32 %v198, %v195
    %v201 = vsub.f32 %v199, %v196
    %v202 = vmul.f32 %v200, 0.5
    %v203 = vmul.f32 %v201, 0.5
    %v204 = vadd.f32 %v195, %v202
    %v205 = vadd.f32 %v196, %v203
    %vm206 = vcmp.ge.f32.partialorder %v204, 1.0
    %vm207 = vcmp.ge.f32.partialorder %v205, 1.0
    %vm208 = vmpackc.low %vm207, %vm206
    %v209 = vsel %vm208, 16711935, 0
    %v210 = vsel %vm208, 16711935, 0
    %v211 = vpack.c.b8 %v210, %v209
    %vm212 = vnez %v211
    %v213 = vsel %vm212, 16843009, 0
    %v214 = vunpack.c.0.s8 %v213
    %v215 = vunpack.c.1.s8 %v213
    %v216 = vpack.c.b16 %v214, %v214
    %v217 = vpack.c.b8 %v216, %v216
    %v218 = vpack.c.b16 %v215, %v215
    %v219 = vpack.c.b8 %v218, %v218
    %s220 = scalar_lea.vmem [#allocation7], 20
    %221 = vst [vmem:[%s220] sm:$0x3] %v217
    %222 = vst [vmem:[%s220 + $0x2] sm:$0x3] %v219
    %v223 = vsel %vm206, 0.0, %v204
    %v224 = vsel %vm207, 0.0, %v205
    %s225 = scalar_lea.vmem [#allocation2], 96
    %v226 = vld [vmem:[%s225] sm:$0xff]
    %v227 = vld [vmem:[%s225 + $0x8] sm:$0xff]
    %v228 = vsub.f32 %v226, %v223
    %v229 = vsub.f32 %v227, %v224
    %v230 = vmul.f32 %v228, 0.5
    %v231 = vmul.f32 %v229, 0.5
    %v232 = vadd.f32 %v223, %v230
    %v233 = vadd.f32 %v224, %v231
    %vm234 = vcmp.ge.f32.partialorder %v232, 1.0
    %vm235 = vcmp.ge.f32.partialorder %v233, 1.0
    %vm236 = vmpackc.low %vm235, %vm234
    %v237 = vsel %vm236, 16711935, 0
    %v238 = vsel %vm236, 16711935, 0
    %v239 = vpack.c.b8 %v238, %v237
    %vm240 = vnez %v239
    %v241 = vsel %vm240, 16843009, 0
    %v242 = vunpack.c.0.s8 %v241
    %v243 = vunpack.c.1.s8 %v241
    %v244 = vpack.c.b16 %v242, %v242
    %v245 = vpack.c.b8 %v244, %v244
    %v246 = vpack.c.b16 %v243, %v243
    %v247 = vpack.c.b8 %v246, %v246
    %s248 = scalar_lea.vmem [#allocation7], 24
    %249 = vst [vmem:[%s248] sm:$0x3] %v245
    %250 = vst [vmem:[%s248 + $0x2] sm:$0x3] %v247
    %v251 = vsel %vm234, 0.0, %v232
    %v252 = vsel %vm235, 0.0, %v233
    %s253 = scalar_lea.vmem [#allocation2], 112
    %v254 = vld [vmem:[%s253] sm:$0xff]
    %v255 = vld [vmem:[%s253 + $0x8] sm:$0xff]
    %v256 = vsub.f32 %v254, %v251
    %v257 = vsub.f32 %v255, %v252
    %v258 = vmul.f32 %v256, 0.5
    %v259 = vmul.f32 %v257, 0.5
    %v260 = vadd.f32 %v251, %v258
    %v261 = vadd.f32 %v252, %v259
    %vm262 = vcmp.ge.f32.partialorder %v260, 1.0
    %vm263 = vcmp.ge.f32.partialorder %v261, 1.0
    %vm264 = vmpackc.low %vm263, %vm262
    %v265 = vsel %vm264, 16711935, 0
    %v266 = vsel %vm264, 16711935, 0
    %v267 = vpack.c.b8 %v266, %v265
    %vm268 = vnez %v267
    %v269 = vsel %vm268, 16843009, 0
    %v270 = vunpack.c.0.s8 %v269
    %v271 = vunpack.c.1.s8 %v269
    %v272 = vpack.c.b16 %v270, %v270
    %v273 = vpack.c.b8 %v272, %v272
    %v274 = vpack.c.b16 %v271, %v271
    %v275 = vpack.c.b8 %v274, %v274
    %s276 = scalar_lea.vmem [#allocation7], 28
    %277 = vst [vmem:[%s276] sm:$0x3] %v273
    %278 = vst [vmem:[%s276 + $0x2] sm:$0x3] %v275
    %v279 = vsel %vm262, 0.0, %v260
    %v280 = vsel %vm263, 0.0, %v261
    %281 = vst [vmem:[#allocation8] sm:$0xff] %v279
    %282 = vst [vmem:[#allocation8 + $0x8] sm:$0xff] %v280
    // Predicated region
    $region22: #{_multi_step_call.1} parent=1 // pred_check
      _
    $region23: #{_multi_step_call.1} parent=1 // pred_check_branch
      %284 = sbr.rel (0) target = $region25
    $region24: #{_multi_step_call.1} parent=1 // pred_region
      %286 = vsyncadd [#allocation4], 0
      %s287 = sshll.u32 [#allocation7], 4
      %s288 = int_to_ptr.vmem [resolvable:$true] %s287
      %s289 = sshll.u32 %s2, 4
      %s290 = int_to_ptr.hbm [resolvable:$true] %s289
      %295 = dma.vmem_to_hbm [thread:$0]  %s288, 512, %s290, [#allocation4], 32, 32, 2
    $region25: #{_multi_step_call.1} parent=1 // pred_fallthru
      _
    // Predicated region
    $region26: #{_multi_step_call.1} parent=1 // pred_check
      _
    $region27: #{_multi_step_call.1} parent=1 // pred_check_branch
      %297 = sbr.rel (0) target = $region29
    $region28: #{_multi_step_call.1} parent=1 // pred_region
      %299 = vsyncadd [#allocation9], 0
      %s300 = sshll.u32 [#allocation8], 4
      %s301 = int_to_ptr.vmem [resolvable:$true] %s300
      %s302 = sshll.u32 %s3, 4
      %s303 = int_to_ptr.hbm [resolvable:$true] %s302
      %308 = dma.vmem_to_hbm [thread:$0]  %s301, 256, %s303, [#allocation9], 128, 128, 8
    $region29: #{_multi_step_call.1} parent=1 // pred_fallthru
      _
    // Predicated region
    $region30: #{_multi_step_call.1} parent=1 // pred_check
      _
    $region31: #{_multi_step_call.1} parent=1 // pred_check_branch
      %310 = sbr.rel (0) target = $region33
    $region32: #{_multi_step_call.1} parent=1 // pred_region
      %312 = dma.done [#allocation4], 512
    $region33: #{_multi_step_call.1} parent=1 // pred_fallthru
      _
    // Predicated region
    $region34: #{_multi_step_call.1} parent=1 // pred_check
      _
    $region35: #{_multi_step_call.1} parent=1 // pred_check_branch
      %314 = sbr.rel (0) target = $region37
    $region36: #{_multi_step_call.1} parent=1 // pred_region
      %316 = dma.done [#allocation9], 256
    $region37: #{_multi_step_call.1} parent=1 // pred_fallthru
      _
    %317 = vsyncpa [#allocation3], 1
    %318 = vsyncpa [#allocation6], 1
    %319 = vsyncpa [#allocation4], 1
    %320 = vsyncpa [#allocation9], 1

</llo_original>
